<compile_context>
chip_gen: v6e
topology: v6e:2x2x1
jax: 0.10.0
libtpu: 0.0.40
codegen_flags: <defaults>
</compile_context>

<pallas_src>
import numpy as np

import jax
import jax.numpy as jnp
from jax import lax
from jax.experimental import pallas as pl
from jax.experimental.pallas import tpu as pltpu

# ---- ConformerBlock(dim=256, dim_head=64, heads=4, ff_mult=4,
#                     conv_expansion_factor=2, conv_kernel_size=31) ----
DIM = 256
HEADS = 4
DIM_HEAD = 64
FF_INNER = DIM * 4          # 1024
CONV_INNER = DIM * 2        # 512
KERNEL = 31
PAD = KERNEL // 2           # 15 == calc_same_padding(31)
MAX_POS = 512
NUM_BLOCKS = 16
LN_EPS = 1e-5
BN_EPS = 1e-5
SCALE = DIM_HEAD ** -0.5

# Packed per-block "small vector" layout (single DMA per block).  All offsets are
# multiples of 128 so in-kernel lane slices are aligned.
_VEC_LAYOUT = (
    ("ff1_g", DIM), ("ff1_b", DIM), ("ff1_b1", FF_INNER), ("ff1_b2", DIM),
    ("at_g", DIM), ("at_b", DIM), ("bo", DIM),
    ("cv_g", DIM), ("cv_b", DIM), ("cb1", 2 * CONV_INNER),
    ("dw_b", CONV_INNER), ("cb2", DIM),
    ("ff2_g", DIM), ("ff2_b", DIM), ("ff2_b1", FF_INNER), ("ff2_b2", DIM),
    ("pn_g", DIM), ("pn_b", DIM),
    ("dw_w", KERNEL * CONV_INNER),      # BN-folded depthwise taps, flattened
)
_VEC_OFFSETS = {}
_off = 0
for _name, _len in _VEC_LAYOUT:
    _VEC_OFFSETS[_name] = (_off, _len)
    _off += _len
VEC_TOTAL = _off


# --------------------------- pltpu.roll convention probe ---------------------------

_ROLL_CFG = None


def _roll_config():
    """One-time tiny pallas_calls that pin down pltpu.roll's direction and the
    strided-roll (per-row shift) convention on this backend."""
    global _ROLL_CFG
    if _ROLL_CFG is not None:
        return _ROLL_CFG

    rows, cols = 8, 128
    x = jnp.broadcast_to(jnp.arange(cols, dtype=jnp.float32), (rows, cols))
    xn = np.asarray(x)

    def plain_kernel(x_ref, o_ref):
        o_ref[...] = pltpu.roll(x_ref[...], 1, 1)

    plain = np.asarray(
        pl.pallas_call(plain_kernel,
                       out_shape=jax.ShapeDtypeStruct((rows, cols), jnp.float32))(x))
    plain_jnp = bool(np.allclose(plain, np.roll(xn, 1, axis=1)))
    if not plain_jnp and not np.allclose(plain, np.roll(xn, -1, axis=1)):
        # TODO(synk): unexpected pltpu.roll convention; assume jnp.roll semantics.
        plain_jnp = True

    strided_ok = False
    try:
        def strided_kernel(x_ref, o_ref):
            o_ref[...] = pltpu.roll(x_ref[...], 0, 1, stride=1, stride_axis=0)

        st = np.asarray(
            pl.pallas_call(strided_kernel,
                           out_shape=jax.ShapeDtypeStruct((rows, cols), jnp.float32))(x))
        want = np.stack([np.roll(xn[r], r) for r in range(rows)])
        strided_ok = bool(np.allclose(st, want))
    except Exception:
        strided_ok = False

    _ROLL_CFG = {"plain_jnp": plain_jnp, "strided_ok": strided_ok}
    return _ROLL_CFG


# --------------------------- in-kernel helpers ---------------------------

def _layernorm(x, g, b):
    mu = jnp.mean(x, axis=-1, keepdims=True)
    var = jnp.mean((x - mu) ** 2, axis=-1, keepdims=True)
    return (x - mu) * lax.rsqrt(var + LN_EPS) * g + b


def _swish(x):
    return x * jax.nn.sigmoid(x)


def _ff_half(x, g, b, w1, b1, w2, b2):
    # Scale(0.5, PreNorm(FeedForward)) + residual; bf16 matmuls, f32 accumulation.
    h = _layernorm(x, g, b).astype(jnp.bfloat16)
    h = jnp.dot(h, w1, preferred_element_type=jnp.float32) + b1
    h = _swish(h).astype(jnp.bfloat16)
    h = jnp.dot(h, w2, preferred_element_type=jnp.float32) + b2
    return x + 0.5 * h


def _barrel_shear(p, roll_fn):
    # out[i, m] = p[i, (m - i) mod Wp]  (row i rolled by +i, jnp.roll sense), built
    # from log2(n) plain lane rolls + per-row bit selects.  Fallback when the
    # strided roll convention could not be confirmed.
    n = p.shape[0]
    ii = lax.broadcasted_iota(jnp.int32, p.shape, 0)
    step = 1
    while step < n:
        rolled = roll_fn(p, step, 1)
        p = jnp.where((ii & step) != 0, rolled, p)
        step *= 2
    return p


def _attention(x, bt, n, g, b, wq, wkv, wo, bo, rel_w, shear):
    # PreNorm multi-head self-attention with Shaw relative positions.
    rows = bt * n
    h = _layernorm(x, g, b).astype(jnp.bfloat16)
    q = jnp.dot(h, wq, preferred_element_type=jnp.float32)       # (rows, 256)
    kv = jnp.dot(h, wkv, preferred_element_type=jnp.float32)     # (rows, 512)

    out = jnp.zeros((rows, DIM), jnp.float32)
    for hh in range(HEADS):
        lo = hh * DIM_HEAD
        qh = q[:, lo:lo + DIM_HEAD].astype(jnp.bfloat16)                        # (rows, 64)
        kh = kv[:, lo:lo + DIM_HEAD].astype(jnp.bfloat16)
        vh = kv[:, HEADS * DIM_HEAD + lo:
                   HEADS * DIM_HEAD + lo + DIM_HEAD].astype(jnp.bfloat16)
        q3 = qh.reshape(bt, n, DIM_HEAD)
        k3 = kh.reshape(bt, n, DIM_HEAD)
        v3 = vh.reshape(bt, n, DIM_HEAD)

        dots = jnp.einsum('bid,bjd->bij', q3, k3,
                          preferred_element_type=jnp.float32)                   # (bt, n, n)
        # Non-materialized rel-pos bias: P = q @ window, then per-row lane shear.
        pfull = jnp.dot(qh, rel_w, preferred_element_type=jnp.float32)          # (rows, Wp)
        bias = jnp.stack(
            [shear(pfull[bb * n:(bb + 1) * n])[:, :n] for bb in range(bt)], axis=0)

        logits = (dots + bias) * SCALE
        logits = logits - jnp.max(logits, axis=-1, keepdims=True)
        p = jnp.exp(logits)
        attn = p * pl.reciprocal(jnp.sum(p, axis=-1, keepdims=True), approx=True)
        oh = jnp.einsum('bij,bjd->bid', attn.astype(jnp.bfloat16), v3,
                        preferred_element_type=jnp.float32)                     # (bt, n, 64)
        # Per-head slice of the output projection avoids a lane concat.
        out = out + jnp.dot(oh.reshape(rows, DIM_HEAD).astype(jnp.bfloat16),
                            wo[lo:lo + DIM_HEAD, :],
                            preferred_element_type=jnp.float32)
    return x + out + bo


def _conv_module(x, bt, n, g, b, w1, b1, dwflat, dwb, w2, b2, roll_fn):
    rows = bt * n
    h = _layernorm(x, g, b).astype(jnp.bfloat16)
    h = jnp.dot(h, w1, preferred_element_type=jnp.float32) + b1        # (rows, 1024)
    h = h[:, :CONV_INNER] * jax.nn.sigmoid(h[:, CONV_INNER:])          # GLU -> (rows, 512)

    # Depthwise conv1d, kernel 31, "same" (15, 15) zero padding, groups == channels.
    # Tap kk at offset d = kk - PAD: roll the flat (rows, C) activation along the
    # sublane axis (XLU) and mask rows whose source falls outside the batch row.
    # BatchNorm (eval) is folded into dwflat / dwb host-side.
    seq = lax.broadcasted_iota(jnp.int32, (bt, n, 1), 1).reshape(rows, 1)
    acc = jnp.zeros((rows, CONV_INNER), jnp.float32)
    for kk in range(KERNEL):
        d = kk - PAD
        tap = roll_fn(h, -d, 0)                # tap[r] = h[r + d]
        if d < 0:
            tap = jnp.where(seq >= -d, tap, 0.0)
        elif d > 0:
            tap = jnp.where(seq < n - d, tap, 0.0)
        acc = acc + tap * dwflat[:, kk * CONV_INNER:(kk + 1) * CONV_INNER]
    hcv = acc + dwb
    hcv = _swish(hcv).astype(jnp.bfloat16)
    hcv = jnp.dot(hcv, w2, preferred_element_type=jnp.float32) + b2
    return x + hcv


# --------------------------- fused conformer-blocks kernel ---------------------------

def _make_blocks_kernel(bt, n, strided_ok, plain_jnp):
    def roll_fn(x, s, axis):
        # jnp.roll(x, s, axis) semantics regardless of the backend's roll direction.
        size = x.shape[axis]
        a = (s % size) if plain_jnp else ((-s) % size)
        if a == 0:
            return x
        return pltpu.roll(x, a, axis)

    def shear(p):
        if strided_ok:
            return pltpu.roll(p, 0, 1, stride=1, stride_axis=0)
        return _barrel_shear(p, roll_fn)

    def kernel(x_ref, vec_ref, rel_ref, f1w1_ref, f1w2_ref, wq_ref, wkv_ref,
               wo_ref, cw1_ref, cw2_ref, f2w1_ref, f2w2_ref, o_ref):
        @pl.when(pl.program_id(1) == 0)
        def _():                     # new batch tile: init the VMEM-resident carry
            o_ref[...] = x_ref[...]

        vec = vec_ref[0]             # (1, VEC_TOTAL) f32

        def vp(name):
            off, ln = _VEC_OFFSETS[name]
            return vec[:, off:off + ln]

        x = o_ref[...].astype(jnp.float32).reshape(bt * n, DIM)

        x = _ff_half(x, vp("ff1_g"), vp("ff1_b"), f1w1_ref[0], vp("ff1_b1"),
                     f1w2_ref[0], vp("ff1_b2"))
        x = _attention(x, bt, n, vp("at_g"), vp("at_b"), wq_ref[0], wkv_ref[0],
                       wo_ref[0], vp("bo"), rel_ref[0], shear)
        x = _conv_module(x, bt, n, vp("cv_g"), vp("cv_b"), cw1_ref[0], vp("cb1"),
                         vp("dw_w"), vp("dw_b"), cw2_ref[0], vp("cb2"), roll_fn)
        x = _ff_half(x, vp("ff2_g"), vp("ff2_b"), f2w1_ref[0], vp("ff2_b1"),
                     f2w2_ref[0], vp("ff2_b2"))
        x = _layernorm(x, vp("pn_g"), vp("pn_b"))          # post LayerNorm

        o_ref[...] = x.reshape(bt, n, DIM).astype(o_ref.dtype)

    return kernel


# --------------------------- projection / head kernels ---------------------------

def linear_kernel(x_ref, w_ref, b_ref, o_ref):
    x = x_ref[...].astype(jnp.bfloat16)
    o_ref[...] = (jnp.dot(x, w_ref[...], preferred_element_type=jnp.float32)
                  + b_ref[...]).astype(o_ref.dtype)


def linear_apply(x2d, w, b, row_tile=512):
    rows, feat = x2d.shape
    tr = rows if rows <= row_tile else row_tile
    grid = (pl.cdiv(rows, tr),)
    return pl.pallas_call(
        linear_kernel,
        out_shape=jax.ShapeDtypeStruct((rows, w.shape[1]), jnp.float32),
        grid_spec=pltpu.PrefetchScalarGridSpec(
            num_scalar_prefetch=0,
            grid=grid,
            in_specs=[pl.BlockSpec((tr, feat), lambda i: (i, 0)),
                      pl.BlockSpec(w.shape, lambda i: (0, 0)),
                      pl.BlockSpec(b.shape, lambda i: (0, 0))],
            out_specs=pl.BlockSpec((tr, w.shape[1]), lambda i: (i, 0)),
        ),
        compiler_params=pltpu.CompilerParams(dimension_semantics=("parallel",)),
    )(x2d, w, b)


def head_kernel(x_ref, w_ref, b_ref, o_ref):
    # fc -> mean over seq (AdaptiveAvgPool1d(1)) -> sigmoid.  The unmasked mean
    # commutes with the affine fc, so pool first and do one small matmul.
    xm = jnp.mean(x_ref[...], axis=1).astype(jnp.bfloat16)           # (B, DIM)
    h = jnp.dot(xm, w_ref[...], preferred_element_type=jnp.float32) + b_ref[...]
    o_ref[...] = jax.nn.sigmoid(h).astype(o_ref.dtype)


def head_apply(x, w, b):
    return pl.pallas_call(
        head_kernel,
        out_shape=jax.ShapeDtypeStruct((x.shape[0], w.shape[1]), jnp.float32),
    )(x, w, b)


# --------------------------- wrappers ---------------------------

def _vmem_limit_bytes():
    # Stay under the smallest per-core VMEM across generations (v7x = 64 MiB).
    limit = 48 * 1024 * 1024
    try:
        cap = int(pltpu.get_tpu_info().vmem_capacity_bytes)
        limit = min(limit, cap * 3 // 4)
    except Exception:
        pass
    return limit


def _pick_batch_tile(batch, n):
    # Prefer the largest batch tile (divisor of batch) with a modest row count:
    # bigger tiles amortize per-block weight DMA (the dominant traffic) and fill
    # the MXU M dimension; once rows are plentiful, smaller tiles keep a >=2-way
    # "parallel" grid axis for v7x's two TensorCores and bound attention VMEM.
    target_rows = 512
    best = 1
    for cand in range(1, batch + 1):
        if batch % cand == 0 and cand * n <= max(target_rows, n):
            best = cand
    return best


def _build_rel_windows(rel_tables, n):
    # Shaw tables (L, 2*MAX_POS+1, 64) -> per-block lane windows (L, 64, Wp).
    # Column m encodes relative distance (i - j) for m == (j - i) mod Wp, so the
    # in-kernel per-row shear turns P = q @ window into the (n, n) bias.
    wp = max(128, ((2 * n + 127) // 128) * 128)             # >= 2n-1, lane aligned
    m = jnp.arange(wp, dtype=jnp.int32)
    rel_dist = jnp.where(m < n, -m, wp - m)
    idx = jnp.clip(rel_dist, -MAX_POS, MAX_POS) + MAX_POS
    win = jnp.take(rel_tables, idx, axis=1)                 # (L, wp, 64)
    return jnp.swapaxes(win, 1, 2).astype(jnp.bfloat16)     # (L, 64, wp)


def conformer_blocks_apply(x, blocks):
    B, N, _ = x.shape
    bt = _pick_batch_tile(B, N)
    cfg = _roll_config()

    rel_w = _build_rel_windows(blocks["rel_table"], N)

    # Fold eval-mode BatchNorm into the depthwise conv (host-side, f32).
    s = blocks["bn_g"] * lax.rsqrt(blocks["bn_v"] + BN_EPS)                 # (L,1,512)
    dw_f = (blocks["dw_w"] * s).reshape(NUM_BLOCKS, 1, KERNEL * CONV_INNER)
    dwb_f = (blocks["dw_b"] - blocks["bn_m"]) * s + blocks["bn_b"]          # (L,1,512)

    vsrc = dict(blocks)
    vsrc["dw_b"] = dwb_f
    vsrc["dw_w"] = dw_f
    vec = jnp.concatenate(
        [vsrc[name].astype(jnp.float32).reshape(NUM_BLOCKS, 1, ln)
         for name, ln in _VEC_LAYOUT], axis=-1)                             # (L,1,VEC_TOTAL)

    mats = [rel_w] + [blocks[k] for k in
                      ("ff1_w1", "ff1_w2", "wq", "wkv", "wo",
                       "cw1", "cw2", "ff2_w1", "ff2_w2")]

    def spec3(arr):
        return pl.BlockSpec((1,) + tuple(arr.shape[1:]), lambda b, l: (l, 0, 0))

    grid_spec = pltpu.PrefetchScalarGridSpec(
        num_scalar_prefetch=0,
        grid=(B // bt, NUM_BLOCKS),
        in_specs=[pl.BlockSpec((bt, N, DIM), lambda b, l: (b, 0, 0)),
                  spec3(vec)] + [spec3(m) for m in mats],
        out_specs=pl.BlockSpec((bt, N, DIM), lambda b, l: (b, 0, 0)),
    )
    kernel = _make_blocks_kernel(bt, N, cfg["strided_ok"], cfg["plain_jnp"])
    return pl.pallas_call(
        kernel,
        out_shape=jax.ShapeDtypeStruct(x.shape, x.dtype),
        grid_spec=grid_spec,
        compiler_params=pltpu.CompilerParams(
            dimension_semantics=("parallel", "arbitrary"),
            vmem_limit_bytes=_vmem_limit_bytes(),
        ),
    )(x, vec, *mats)


@jax.jit
def conformer_model_forward(logmels, bEmb, params):
    B, T1, F1 = logmels.shape
    _, T2, F2 = bEmb.shape
    lm = linear_apply(logmels.reshape(B * T1, F1),
                      params["projSr_w"], params["projSr_b"]).reshape(B, T1, DIM)
    be = linear_apply(bEmb.reshape(B * T2, F2),
                      params["projTr_w"], params["projTr_b"]).reshape(B, T2, DIM)
    x = jnp.concatenate([lm, be], axis=1)                  # cat along seq dim
    x = conformer_blocks_apply(x, params["blocks"])        # 16 fused conformer blocks
    out = head_apply(x, params["fc_w"], params["fc_b"])    # (B, num_classes)
    return out[:, :, None]                                 # (B, num_classes, 1)


# --------------------------- deterministic param init ---------------------------

def init_params(key, feat_sr=40, feat_tr=768, num_classes=8):
    kit = iter(jax.random.split(key, 64))

    def nrm(shape, fan_in, dtype=jnp.bfloat16):
        return (jax.random.normal(next(kit), shape, jnp.float32)
                * (fan_in ** -0.5)).astype(dtype)

    def ones(d):
        return jnp.ones((NUM_BLOCKS, 1, d), jnp.float32)

    def zeros(d):
        return jnp.zeros((NUM_BLOCKS, 1, d), jnp.float32)

    L = NUM_BLOCKS
    blocks = {
        "ff1_g": ones(DIM), "ff1_b": zeros(DIM),
        "ff1_w1": nrm((L, DIM, FF_INNER), DIM), "ff1_b1": zeros(FF_INNER),
        "ff1_w2": nrm((L, FF_INNER, DIM), FF_INNER), "ff1_b2": zeros(DIM),
        "at_g": ones(DIM), "at_b": zeros(DIM),
        "wq": nrm((L, DIM, HEADS * DIM_HEAD), DIM),
        "wkv": nrm((L, DIM, 2 * HEADS * DIM_HEAD), DIM),
        "wo": nrm((L, HEADS * DIM_HEAD, DIM), HEADS * DIM_HEAD),
        "bo": zeros(DIM),
        "rel_table": 0.02 * jax.random.normal(
            next(kit), (L, 2 * MAX_POS + 1, DIM_HEAD), jnp.float32),
        "cv_g": ones(DIM), "cv_b": zeros(DIM),
        "cw1": nrm((L, DIM, 2 * CONV_INNER), DIM), "cb1": zeros(2 * CONV_INNER),
        "dw_w": nrm((L, KERNEL, CONV_INNER), KERNEL, jnp.float32),
        "dw_b": zeros(CONV_INNER),
        "bn_g": ones(CONV_INNER), "bn_b": zeros(CONV_INNER),
        "bn_m": zeros(CONV_INNER), "bn_v": ones(CONV_INNER),
        "cw2": nrm((L, CONV_INNER, DIM), CONV_INNER), "cb2": zeros(DIM),
        "ff2_g": ones(DIM), "ff2_b": zeros(DIM),
        "ff2_w1": nrm((L, DIM, FF_INNER), DIM), "ff2_b1": zeros(FF_INNER),
        "ff2_w2": nrm((L, FF_INNER, DIM), FF_INNER), "ff2_b2": zeros(DIM),
        "pn_g": ones(DIM), "pn_b": zeros(DIM),
    }
    return {
        "projSr_w": nrm((feat_sr, DIM), feat_sr),
        "projSr_b": jnp.zeros((1, DIM), jnp.float32),
        "projTr_w": nrm((feat_tr, DIM), feat_tr),
        "projTr_b": jnp.zeros((1, DIM), jnp.float32),
        "fc_w": nrm((DIM, num_classes), DIM),
        "fc_b": jnp.zeros((1, num_classes), jnp.float32),
        "blocks": blocks,
    }


# --------------------------- main ---------------------------

if __name__ == "__main__":
    B, T1, T2 = 2, 8, 8
    FEAT_SR, FEAT_TR = 40, 768          # projSr: 40->256, projTr: 768->256
    NUM_CLASSES = 8                     # fc: hidden_size(256)*1 -> num_classes

    key = jax.random.PRNGKey(0)
    k_lm, k_be, k_p = jax.random.split(key, 3)
    logmels = jax.random.normal(k_lm, (B, T1, FEAT_SR), jnp.float32)
    bEmb = jax.random.normal(k_be, (B, T2, FEAT_TR), jnp.float32)
    params = init_params(k_p, feat_sr=FEAT_SR, feat_tr=FEAT_TR,
                         num_classes=NUM_CLASSES)

    _roll_config()                      # one-time probe of pltpu.roll conventions
    out = conformer_model_forward(logmels, bEmb, params)
    jax.block_until_ready(out)
    assert out.shape == (B, NUM_CLASSES, 1), out.shape
    assert bool(jnp.all(jnp.isfinite(out))), "non-finite output"
    print("KERNEL_OK")
</pallas_src>

<mosaic_0001>
module attributes {stable_mosaic.version = 11 : i64} {
  func.func @plain_kernel(%arg0: memref<8x128xf32, #tpu.memory_space<vmem>>, %arg1: memref<8x128xf32, #tpu.memory_space<vmem>>) attributes {dimension_semantics = [], scalar_prefetch = 0 : i64, scratch_operands = 0 : i64, tpu.core_type = #tpu.core_type<tc>} {
    %c0 = arith.constant 0 : index
    %c0_0 = arith.constant 0 : index
    %0 = vector.load %arg0[%c0, %c0_0] : memref<8x128xf32, #tpu.memory_space<vmem>>, vector<8x128xf32>
    %c1_i32 = arith.constant 1 : i32
    %1 = tpu.dynamic_rotate %0 by %c1_i32 dim 1 : vector<8x128xf32>, i32 -> vector<8x128xf32>
    %c0_1 = arith.constant 0 : index
    %c0_2 = arith.constant 0 : index
    %2 = vector.load %arg1[%c0_1, %c0_2] : memref<8x128xf32, #tpu.memory_space<vmem>>, vector<8x128xf32>
    tpu.vector_store %arg1[%c0_1, %c0_2], %1 {strides = array<i32>} : memref<8x128xf32, #tpu.memory_space<vmem>>, vector<8x128xf32>,
    return
  }
}

</mosaic_0001>

<llo_original>
// kernel: tpu_custom_call.1
$region0: #{tpu_custom_call.1}
  #allocation0 [shape = 'u32[]', space=smem, size = 0x4, offset = 0x4, fixed_abs, tag = 'smem constant byte address 0x4 - core index']
  #allocation1 [shape = 'u32[144,128]{1,0:T(1,128)}', space=vmem, size = 0x12000, scoped, tag = 'internal scratch']
  %s0 = inlined_call_operand.hbm [shape: f32[8,128], index: 0, kind: input, shape index: {}]
  %s1 = inlined_call_operand.hbm [shape: f32[8,128], index: 1, kind: output, shape index: {}]
  %s2 = sld [smem:[#allocation0]]
  $region18: #{tpu_custom_call.1} parent=0
    _
  %s4 = ssub.s32 1, %s2
  %s5 = scalar_select 0, %s4, %s2
  $region1: #{tpu_custom_call.1} parent=0
    #allocation2 [shape = 'u8[4096]{0}', space=vmem, size = 0x1000, scoped, tag = 'input window, operand 0, single buffered']
    #allocation3 [shape = 's32[1]{0}', space=sflag, size = 0x4, scoped, tag = 'scoped memory for tpu_custom_call.1']
    #allocation4 [shape = 's32[1]{0}', space=sflag, size = 0x4, scoped, tag = 'scoped memory for tpu_custom_call.1']
    #allocation5 [shape = 'u8[4096]{0}', space=vmem, size = 0x1000, scoped, tag = 'output window, operand 0, single buffered']
    %6 = vsyncpa [#allocation3], 0
    %7 = vsyncpa [#allocation4], 0
    // Predicated region
    $region2: #{tpu_custom_call.1} parent=1 // pred_check
      _
    $region3: #{tpu_custom_call.1} parent=1 // pred_check_branch
      %9 = sbr.rel (0) target = $region5
    $region4: #{tpu_custom_call.1} parent=1 // pred_region
      %s11 = ssub.s32 128, 128
      %12 = vsyncadd [#allocation3], %s11
      %s14 = sshll.u32 [#allocation2], 4
      %s15 = int_to_ptr.vmem [resolvable:$true] %s14
      %17 = dma.hbm_to_vmem [thread:$0]  %s0, 128, %s15, [#allocation3]
    $region5: #{tpu_custom_call.1} parent=1 // pred_fallthru
      _
    // Predicated region
    $region6: #{tpu_custom_call.1} parent=1 // pred_check
      _
    $region7: #{tpu_custom_call.1} parent=1 // pred_check_branch
      %19 = sbr.rel (0) target = $region9
    $region8: #{tpu_custom_call.1} parent=1 // pred_region
      %20 = dma.done [#allocation3], 128
    $region9: #{tpu_custom_call.1} parent=1 // pred_fallthru
      _
    %v21 = vld [vmem:[#allocation2] sm:$0xff]
    %22 = vrot.lane.b32.xlu0 %v21, 1
    %v23 = vpop.permute.xlu0 %22
    %24 = vst [vmem:[#allocation5] sm:$0xff] %v23
    // Predicated region
    $region10: #{tpu_custom_call.1} parent=1 // pred_check
      _
    $region11: #{tpu_custom_call.1} parent=1 // pred_check_branch
      %26 = sbr.rel (0) target = $region13
    $region12: #{tpu_custom_call.1} parent=1 // pred_region
      %s28 = ssub.s32 128, 128
      %29 = vsyncadd [#allocation4], %s28
      %s31 = sshll.u32 [#allocation5], 4
      %s32 = int_to_ptr.vmem [resolvable:$true] %s31
      %34 = dma.vmem_to_hbm [thread:$0]  %s32, 128, %s1, [#allocation4]
    $region13: #{tpu_custom_call.1} parent=1 // pred_fallthru
      _
    // Predicated region
    $region14: #{tpu_custom_call.1} parent=1 // pred_check
      _
    $region15: #{tpu_custom_call.1} parent=1 // pred_check_branch
      %36 = sbr.rel (0) target = $region17
    $region16: #{tpu_custom_call.1} parent=1 // pred_region
      %37 = dma.done [#allocation4], 128
    $region17: #{tpu_custom_call.1} parent=1 // pred_fallthru
      _
    %38 = vsyncpa [#allocation3], 1
    %39 = vsyncpa [#allocation4], 1

</llo_original>
